<compile_context>
chip_gen: v6e
topology: v6e:2x2x1
jax: 0.10.0
libtpu: 0.0.40
codegen_flags: <defaults>
</compile_context>

<pallas_src>
import math
import jax
import jax.numpy as jnp
from jax.experimental import pallas as pl
from jax.experimental.pallas import tpu as pltpu


def _round_up(v, m):
    return ((v + m - 1) // m) * m


def _mlp_kernel(x_ref, w0_ref, b0_ref, w1_ref, b1_ref, w2_ref, b2_ref,
                o_ref, acc_ref):
    """Fused 3-layer MLP tile, K-tiled over the input feature dim.

    grid = (batch_tiles, k_tiles). Layer-0 partial products accumulate into
    acc_ref (f32 VMEM scratch); layers 1/2 + the store run once per batch tile
    on the last k step. All widths are padded to 128 -> lane-dense throughout.
    """
    k = pl.program_id(1)

    @pl.when(k == 0)
    def _init():
        acc_ref[...] = jnp.zeros_like(acc_ref)

    # in-kernel f32 -> bf16 cast of the activation tile (cheap VPU op hidden
    # under the MXU; avoids an extra HBM pass over x in the wrapper).
    x = x_ref[...].astype(jnp.bfloat16)
    acc_ref[...] += jnp.dot(x, w0_ref[...], preferred_element_type=jnp.float32)

    @pl.when(k == pl.num_programs(1) - 1)
    def _finalize():
        # layer 0: bias + ReLU
        h = jnp.maximum(acc_ref[...] + b0_ref[...], 0.0).astype(jnp.bfloat16)
        # layer 1: Linear + ReLU
        h = jnp.dot(h, w1_ref[...], preferred_element_type=jnp.float32) + b1_ref[...]
        h = jnp.maximum(h, 0.0).astype(jnp.bfloat16)
        # final layer: Linear, no activation (last_layer=None)
        out = jnp.dot(h, w2_ref[...], preferred_element_type=jnp.float32) + b2_ref[...]
        o_ref[...] = out.astype(o_ref.dtype)   # lane-dense bf16 store


def _resident_spec(shape, index_map):
    """Constant-index (VMEM-resident) block: single-buffer to halve weight VMEM."""
    if hasattr(pl, "Buffered"):
        try:
            return pl.BlockSpec(shape, index_map, pipeline_mode=pl.Buffered(1))
        except TypeError:
            pass
    return pl.BlockSpec(shape, index_map)


def mlp_forward(x, params, *, tile_n=512):
    """x: (N, ...) arbitrary trailing dims; flattened to (N, D) like torch .view."""
    # TODO(synk): kernel is specialized to len(layer_widths) == 2 hidden layers;
    # other depths would need a generated kernel body (or an in-kernel layer loop).
    n = x.shape[0]
    x2d = x.reshape(n, -1).astype(jnp.float32)
    d = x2d.shape[1]
    (w0, b0), (w1, b1), (w2, b2) = params
    h0, h1, num_out = w0.shape[1], w1.shape[1], w2.shape[1]

    # ---- lane-dense padding: every feature dim -> multiple of 128 ------------
    h0p = _round_up(max(h0, 128), 128)
    h1p = _round_up(max(h1, 128), 128)
    op = _round_up(max(num_out, 128), 128)
    dp = _round_up(max(d, 128), 128)

    # ---- generation-aware VMEM budget ----------------------------------------
    try:
        vmem_cap = int(getattr(pltpu.get_tpu_info(), "vmem_capacity_bytes",
                               128 * 1024 * 1024))
    except Exception:
        vmem_cap = 128 * 1024 * 1024
    budget = int(0.65 * vmem_cap)   # ~40 MiB on v7x, ~83 MiB on v5e/v6e

    # ---- tile sizes: tn multiple of 16 (bf16 sublanes), tk multiple of 128 ----
    tn = min(tile_n, _round_up(n, 16))
    # ensure >=2 batch steps so v7x's 2 TCs both get work (harmless on 1-TC parts)
    if pl.cdiv(n, tn) < 2 and _round_up(n, 16) >= 32:
        tn = max(16, _round_up((n + 1) // 2, 16))
    tk = dp

    def vmem_needed(tn_, tk_, ktiles_):
        w0_bufs = 1 if ktiles_ == 1 else 2
        return (
            2 * tn_ * tk_ * 4                       # x f32, double-buffered
            + w0_bufs * tk_ * h0p * 2               # w0 bf16
            + (h0p * h1p + h1p * op) * 2            # w1/w2 bf16, single-buffered
            + (h0p + h1p + op) * 4                  # biases f32
            + 2 * tn_ * op * 2                      # out bf16, double-buffered
            + tn_ * h0p * 4                         # layer-0 acc scratch f32
            + tn_ * (h0p + h1p) * 4                 # materialized activation temps
        )

    # shrink tk first (K-tiled fallback for huge D), then tn
    while vmem_needed(tn, tk, pl.cdiv(dp, tk)) > budget:
        if tk > 512:
            tk = max(512, _round_up(tk // 2, 128))
        elif tn > 16:
            tn = max(16, _round_up(tn // 2, 16))
        elif tk > 128:
            tk = max(128, _round_up(tk // 2, 128))
        else:
            break

    d_fin = _round_up(dp, tk)
    k_tiles = d_fin // tk
    n_pad = _round_up(n, tn)
    n_tiles = n_pad // tn
    grid = (n_tiles, k_tiles)

    # ---- zero-pad operands (zero rows/cols keep the real outputs exact) -------
    xp = jnp.zeros((n_pad, d_fin), jnp.float32).at[:n, :d].set(x2d)
    w0p = jnp.zeros((d_fin, h0p), jnp.bfloat16).at[:d, :h0].set(w0.astype(jnp.bfloat16))
    w1p = jnp.zeros((h0p, h1p), jnp.bfloat16).at[:h0, :h1].set(w1.astype(jnp.bfloat16))
    w2p = jnp.zeros((h1p, op), jnp.bfloat16).at[:h1, :num_out].set(w2.astype(jnp.bfloat16))
    b0p = jnp.zeros((1, h0p), jnp.float32).at[:, :h0].set(b0.astype(jnp.float32))
    b1p = jnp.zeros((1, h1p), jnp.float32).at[:, :h1].set(b1.astype(jnp.float32))
    b2p = jnp.zeros((1, op), jnp.float32).at[:, :num_out].set(b2.astype(jnp.float32))

    needed = vmem_needed(tn, tk, k_tiles)
    vmem_limit = int(min(budget, max(2 * needed, 8 * 1024 * 1024)))

    cost = pl.CostEstimate(
        flops=2 * n_pad * (d_fin * h0p + h0p * h1p + h1p * op),
        transcendentals=0,
        bytes_accessed=(n_pad * d_fin * 4
                        + (d_fin * h0p + h0p * h1p + h1p * op) * 2
                        + (h0p + h1p + op) * 4
                        + n_pad * op * 2),
    )

    w0_spec = (
        _resident_spec((tk, h0p), lambda i, k: (k, 0)) if k_tiles == 1
        else pl.BlockSpec((tk, h0p), lambda i, k: (k, 0))
    )

    out = pl.pallas_call(
        _mlp_kernel,
        out_shape=jax.ShapeDtypeStruct((n_pad, op), jnp.bfloat16),
        grid=grid,
        in_specs=[
            pl.BlockSpec((tn, tk), lambda i, k: (i, k)),      # x: batch + K tiled
            w0_spec,                                          # w0
            _resident_spec((1, h0p), lambda i, k: (0, 0)),    # b0
            _resident_spec((h0p, h1p), lambda i, k: (0, 0)),  # w1
            _resident_spec((1, h1p), lambda i, k: (0, 0)),    # b1
            _resident_spec((h1p, op), lambda i, k: (0, 0)),   # w2
            _resident_spec((1, op), lambda i, k: (0, 0)),     # b2
        ],
        out_specs=pl.BlockSpec((tn, op), lambda i, k: (i, 0)),
        scratch_shapes=[pltpu.VMEM((tn, h0p), jnp.float32)],
        compiler_params=pltpu.CompilerParams(
            dimension_semantics=("parallel", "arbitrary"),
            vmem_limit_bytes=vmem_limit,
        ),
        cost_estimate=cost,
    )(xp, w0p, b0p, w1p, b1p, w2p, b2p)

    # slice away batch / lane padding; return f32 like the torch model
    return out[:n, :num_out].astype(jnp.float32)


def xavier_normal(key, fan_in, fan_out, gain):
    # matches torch.nn.init.xavier_normal_ semantics; stored as (in, out)
    std = gain * math.sqrt(2.0 / (fan_in + fan_out))
    return std * jax.random.normal(key, (fan_in, fan_out), dtype=jnp.float32)


def init_mlp_params(key, input_dim, layer_widths, num_out=1):
    # activation = ReLU -> gain = calculate_gain('relu') = sqrt(2) for hidden
    # layers; final layer uses initialize(gain=1.0). Biases zero.
    gain_hidden = math.sqrt(2.0)
    dims = [input_dim] + list(layer_widths)
    params = []
    keys = jax.random.split(key, len(dims))
    for i in range(len(layer_widths)):
        w = xavier_normal(keys[i], dims[i], dims[i + 1], gain_hidden)
        b = jnp.zeros((1, dims[i + 1]), dtype=jnp.float32)
        params.append((w, b))
    w_last = xavier_normal(keys[-1], dims[-1], num_out, 1.0)
    b_last = jnp.zeros((1, num_out), dtype=jnp.float32)
    params.append((w_last, b_last))
    return params


if __name__ == "__main__":
    key = jax.random.PRNGKey(0)
    k_param, k_data = jax.random.split(key)

    # Small shapes consistent with the module: batch=8, input (4,4,4) -> D=64,
    # hidden widths [32, 32], num_out=1, activation=ReLU.
    batch, c, h, w = 8, 4, 4, 4
    input_dim = c * h * w
    layer_widths = [32, 32]
    num_out = 1

    params = init_mlp_params(k_param, input_dim, layer_widths, num_out)
    x = jax.random.normal(k_data, (batch, c, h, w), dtype=jnp.float32)

    out = mlp_forward(x, params)
    jax.block_until_ready(out)

    # reference in plain JAX, matching the kernel's bf16-input / f32-accum /
    # bf16-store rounding path.
    xr = x.reshape(batch, -1)
    (w0, b0), (w1, b1), (w2, b2) = params
    f32, bf = jnp.float32, jnp.bfloat16
    xb = xr.astype(bf).astype(f32)
    w0b = w0.astype(bf).astype(f32)
    w1b = w1.astype(bf).astype(f32)
    w2b = w2.astype(bf).astype(f32)
    ref = jnp.maximum(xb @ w0b + b0, 0.0)
    ref = jnp.maximum(ref.astype(bf).astype(f32) @ w1b + b1, 0.0)
    ref = ref.astype(bf).astype(f32) @ w2b + b2
    ref = ref.astype(bf).astype(f32)

    assert out.shape == (batch, num_out)
    assert jnp.allclose(out, ref, atol=2e-3, rtol=2e-3)

    print("KERNEL_OK")
</pallas_src>

<mosaic_0001>
module attributes {stable_mosaic.version = 11 : i64} {
  func.func @_mlp_kernel(%arg0: i32, %arg1: i32, %arg2: memref<16x128xf32, #tpu.memory_space<vmem>>, %arg3: memref<128x128xbf16, #tpu.memory_space<vmem>>, %arg4: memref<1x128xf32, #tpu.memory_space<vmem>>, %arg5: memref<128x128xbf16, #tpu.memory_space<vmem>>, %arg6: memref<1x128xf32, #tpu.memory_space<vmem>>, %arg7: memref<128x128xbf16, #tpu.memory_space<vmem>>, %arg8: memref<1x128xf32, #tpu.memory_space<vmem>>, %arg9: memref<16x128xbf16, #tpu.memory_space<vmem>>, %arg10: memref<16x128xf32, #tpu.memory_space<vmem>>) attributes {dimension_semantics = [#tpu.dimension_semantics<parallel>, #tpu.dimension_semantics<arbitrary>], iteration_bounds = array<i64: 1, 1>, scalar_prefetch = 0 : i64, scratch_operands = 1 : i64, tpu.core_type = #tpu.core_type<tc>, window_params = [{transform_indices = @transform_0, window_bounds = array<i64: 16, 128>}, {pipeline_mode = #tpu.pipeline_mode<synchronous>, transform_indices = @transform_1, window_bounds = array<i64: 128, 128>}, {pipeline_mode = #tpu.pipeline_mode<synchronous>, transform_indices = @transform_2, window_bounds = array<i64: 1, 128>}, {pipeline_mode = #tpu.pipeline_mode<synchronous>, transform_indices = @transform_3, window_bounds = array<i64: 128, 128>}, {pipeline_mode = #tpu.pipeline_mode<synchronous>, transform_indices = @transform_4, window_bounds = array<i64: 1, 128>}, {pipeline_mode = #tpu.pipeline_mode<synchronous>, transform_indices = @transform_5, window_bounds = array<i64: 128, 128>}, {pipeline_mode = #tpu.pipeline_mode<synchronous>, transform_indices = @transform_6, window_bounds = array<i64: 1, 128>}, {transform_indices = @transform_7, window_bounds = array<i64: 16, 128>}]} {
    %c0_i32 = arith.constant 0 : i32
    %0 = arith.cmpi eq, %arg1, %c0_i32 : i32
    %1 = arith.extui %0 : i1 to i32
    %c0_i32_0 = arith.constant 0 : i32
    %2 = arith.cmpi ne, %1, %c0_i32_0 : i32
    scf.if %2 {
      %cst_10 = arith.constant 0.000000e+00 : f32
      %13 = vector.broadcast %cst_10 : f32 to vector<16x128xf32>
      %c0_11 = arith.constant 0 : index
      %c0_12 = arith.constant 0 : index
      %14 = vector.load %arg10[%c0_11, %c0_12] : memref<16x128xf32, #tpu.memory_space<vmem>>, vector<16x128xf32>
      tpu.vector_store %arg10[%c0_11, %c0_12], %13 {strides = array<i32>} : memref<16x128xf32, #tpu.memory_space<vmem>>, vector<16x128xf32>,
    } else {
    }
    %c0 = arith.constant 0 : index
    %c0_1 = arith.constant 0 : index
    %3 = vector.load %arg2[%c0, %c0_1] : memref<16x128xf32, #tpu.memory_space<vmem>>, vector<16x128xf32>
    %4 = arith.truncf %3 : vector<16x128xf32> to vector<16x128xbf16>
    %c0_2 = arith.constant 0 : index
    %c0_3 = arith.constant 0 : index
    %5 = vector.load %arg10[%c0_2, %c0_3] : memref<16x128xf32, #tpu.memory_space<vmem>>, vector<16x128xf32>
    %c0_4 = arith.constant 0 : index
    %c0_5 = arith.constant 0 : index
    %6 = vector.load %arg3[%c0_4, %c0_5] : memref<128x128xbf16, #tpu.memory_space<vmem>>, vector<128x128xbf16>
    %cst = arith.constant dense<0.000000e+00> : vector<16x128xf32>
    %7 = tpu.matmul %4, %6, %cst {dimension_numbers = #tpu.dot_dimension_numbers<[1], [0], [0], [1], [0, 0, 1, 1], [], []>} : vector<16x128xbf16>, vector<128x128xbf16>, vector<16x128xf32> -> vector<16x128xf32>
    %8 = arith.addf %5, %7 : vector<16x128xf32>
    %c0_6 = arith.constant 0 : index
    %c0_7 = arith.constant 0 : index
    %9 = vector.load %arg10[%c0_6, %c0_7] : memref<16x128xf32, #tpu.memory_space<vmem>>, vector<16x128xf32>
    tpu.vector_store %arg10[%c0_6, %c0_7], %8 {strides = array<i32>} : memref<16x128xf32, #tpu.memory_space<vmem>>, vector<16x128xf32>,
    %c0_i32_8 = arith.constant 0 : i32
    %10 = arith.cmpi eq, %arg1, %c0_i32_8 : i32
    %11 = arith.extui %10 : i1 to i32
    %c0_i32_9 = arith.constant 0 : i32
    %12 = arith.cmpi ne, %11, %c0_i32_9 : i32
    scf.if %12 {
      %c0_10 = arith.constant 0 : index
      %c0_11 = arith.constant 0 : index
      %13 = vector.load %arg10[%c0_10, %c0_11] : memref<16x128xf32, #tpu.memory_space<vmem>>, vector<16x128xf32>
      %c0_12 = arith.constant 0 : index
      %c0_13 = arith.constant 0 : index
      %14 = vector.load %arg4[%c0_12, %c0_13] : memref<1x128xf32, #tpu.memory_space<vmem>>, vector<1x128xf32>
      %15 = vector.broadcast %14 : vector<1x128xf32> to vector<16x128xf32>
      %16 = arith.addf %13, %15 : vector<16x128xf32>
      %cst_14 = arith.constant 0.000000e+00 : f32
      %17 = vector.broadcast %cst_14 : f32 to vector<16x128xf32>
      %18 = arith.maximumf %16, %17 : vector<16x128xf32>
      %19 = arith.truncf %18 : vector<16x128xf32> to vector<16x128xbf16>
      %c0_15 = arith.constant 0 : index
      %c0_16 = arith.constant 0 : index
      %20 = vector.load %arg5[%c0_15, %c0_16] : memref<128x128xbf16, #tpu.memory_space<vmem>>, vector<128x128xbf16>
      %cst_17 = arith.constant dense<0.000000e+00> : vector<16x128xf32>
      %21 = tpu.matmul %19, %20, %cst_17 {dimension_numbers = #tpu.dot_dimension_numbers<[1], [0], [0], [1], [0, 0, 1, 1], [], []>} : vector<16x128xbf16>, vector<128x128xbf16>, vector<16x128xf32> -> vector<16x128xf32>
      %c0_18 = arith.constant 0 : index
      %c0_19 = arith.constant 0 : index
      %22 = vector.load %arg6[%c0_18, %c0_19] : memref<1x128xf32, #tpu.memory_space<vmem>>, vector<1x128xf32>
      %23 = vector.broadcast %22 : vector<1x128xf32> to vector<16x128xf32>
      %24 = arith.addf %21, %23 : vector<16x128xf32>
      %cst_20 = arith.constant 0.000000e+00 : f32
      %25 = vector.broadcast %cst_20 : f32 to vector<16x128xf32>
      %26 = arith.maximumf %24, %25 : vector<16x128xf32>
      %27 = arith.truncf %26 : vector<16x128xf32> to vector<16x128xbf16>
      %c0_21 = arith.constant 0 : index
      %c0_22 = arith.constant 0 : index
      %28 = vector.load %arg7[%c0_21, %c0_22] : memref<128x128xbf16, #tpu.memory_space<vmem>>, vector<128x128xbf16>
      %cst_23 = arith.constant dense<0.000000e+00> : vector<16x128xf32>
      %29 = tpu.matmul %27, %28, %cst_23 {dimension_numbers = #tpu.dot_dimension_numbers<[1], [0], [0], [1], [0, 0, 1, 1], [], []>} : vector<16x128xbf16>, vector<128x128xbf16>, vector<16x128xf32> -> vector<16x128xf32>
      %c0_24 = arith.constant 0 : index
      %c0_25 = arith.constant 0 : index
      %30 = vector.load %arg8[%c0_24, %c0_25] : memref<1x128xf32, #tpu.memory_space<vmem>>, vector<1x128xf32>
      %31 = vector.broadcast %30 : vector<1x128xf32> to vector<16x128xf32>
      %32 = arith.addf %29, %31 : vector<16x128xf32>
      %33 = arith.truncf %32 : vector<16x128xf32> to vector<16x128xbf16>
      %c0_26 = arith.constant 0 : index
      %c0_27 = arith.constant 0 : index
      %34 = vector.load %arg9[%c0_26, %c0_27] : memref<16x128xbf16, #tpu.memory_space<vmem>>, vector<16x128xbf16>
      tpu.vector_store %arg9[%c0_26, %c0_27], %33 {strides = array<i32>} : memref<16x128xbf16, #tpu.memory_space<vmem>>, vector<16x128xbf16>,
    } else {
    }
    return
  }
  func.func @transform_0(%arg0: i32, %arg1: i32) -> (i32, i32) {
    %c0_i32 = arith.constant 0 : i32
    return %arg0, %arg1 : i32, i32
  }
  func.func @transform_1(%arg0: i32, %arg1: i32) -> (i32, i32) {
    %c0_i32 = arith.constant 0 : i32
    %c0_i32_0 = arith.constant 0 : i32
    return %arg1, %c0_i32 : i32, i32
  }
  func.func @transform_2(%arg0: i32, %arg1: i32) -> (i32, i32) {
    %c0_i32 = arith.constant 0 : i32
    %c0_i32_0 = arith.constant 0 : i32
    %c0_i32_1 = arith.constant 0 : i32
    return %c0_i32, %c0_i32_0 : i32, i32
  }
  func.func @transform_3(%arg0: i32, %arg1: i32) -> (i32, i32) {
    %c0_i32 = arith.constant 0 : i32
    %c0_i32_0 = arith.constant 0 : i32
    %c0_i32_1 = arith.constant 0 : i32
    return %c0_i32, %c0_i32_0 : i32, i32
  }
  func.func @transform_4(%arg0: i32, %arg1: i32) -> (i32, i32) {
    %c0_i32 = arith.constant 0 : i32
    %c0_i32_0 = arith.constant 0 : i32
    %c0_i32_1 = arith.constant 0 : i32
    return %c0_i32, %c0_i32_0 : i32, i32
  }
  func.func @transform_5(%arg0: i32, %arg1: i32) -> (i32, i32) {
    %c0_i32 = arith.constant 0 : i32
    %c0_i32_0 = arith.constant 0 : i32
    %c0_i32_1 = arith.constant 0 : i32
    return %c0_i32, %c0_i32_0 : i32, i32
  }
  func.func @transform_6(%arg0: i32, %arg1: i32) -> (i32, i32) {
    %c0_i32 = arith.constant 0 : i32
    %c0_i32_0 = arith.constant 0 : i32
    %c0_i32_1 = arith.constant 0 : i32
    return %c0_i32, %c0_i32_0 : i32, i32
  }
  func.func @transform_7(%arg0: i32, %arg1: i32) -> (i32, i32) {
    %c0_i32 = arith.constant 0 : i32
    %c0_i32_0 = arith.constant 0 : i32
    return %arg0, %c0_i32 : i32, i32
  }
}

</mosaic_0001>

<llo_original>
// kernel: tpu_custom_call.1
$region0: #{tpu_custom_call.1}
  #allocation0 [shape = 'u32[]', space=smem, size = 0x4, offset = 0x4, fixed_abs, tag = 'smem constant byte address 0x4 - core index']
  #allocation1 [shape = 'u32[144,128]{1,0:T(1,128)}', space=vmem, size = 0x12000, scoped, tag = 'internal scratch']
  #allocation2 [shape = 'f32[16,128]{1,0:T(8,128)}', space=vmem, size = 0x2000, scoped, tag = 'scratch operand']
  %s0 = inlined_call_operand.hbm [shape: f32[16,128], index: 0, kind: input, shape index: {}]
  %s1 = inlined_call_operand.hbm [shape: bf16[128,128], index: 1, kind: input, shape index: {}]
  %s2 = inlined_call_operand.vmem [shape: f32[1,128], index: 2, kind: input, shape index: {}]
  %s3 = inlined_call_operand.hbm [shape: bf16[128,128], index: 3, kind: input, shape index: {}]
  %s4 = inlined_call_operand.vmem [shape: f32[1,128], index: 4, kind: input, shape index: {}]
  %s5 = inlined_call_operand.hbm [shape: bf16[128,128], index: 5, kind: input, shape index: {}]
  %s6 = inlined_call_operand.vmem [shape: f32[1,128], index: 6, kind: input, shape index: {}]
  %s7 = inlined_call_operand.hbm [shape: bf16[16,128], index: 7, kind: output, shape index: {}]
  %s8 = sld [smem:[#allocation0]]
  $region62: #{tpu_custom_call.1} parent=0
    _
  %s10 = ssub.s32 1, %s8
  %s11 = scalar_select 0, %s10, %s8
  $region1: #{tpu_custom_call.1} parent=0
    #allocation3 [shape = 'u8[8192]{0}', space=vmem, size = 0x2000, scoped, tag = 'input window, operand 0, single buffered']
    #allocation4 [shape = 's32[1]{0}', space=sflag, size = 0x4, scoped, tag = 'scoped memory for tpu_custom_call.1']
    #allocation5 [shape = 's32[1]{0}', space=sflag, size = 0x4, scoped, tag = 'scoped memory for tpu_custom_call.1']
    #allocation6 [shape = 'u8[32768]{0}', space=vmem, size = 0x8000, scoped, tag = 'input window, operand 1, single buffered']
    #allocation7 [shape = 's32[1]{0}', space=sflag, size = 0x4, scoped, tag = 'scoped memory for tpu_custom_call.1']
    #allocation8 [shape = 'u8[32768]{0}', space=vmem, size = 0x8000, scoped, tag = 'input window, operand 3, single buffered']
    #allocation9 [shape = 'u8[32768]{0}', space=vmem, size = 0x8000, scoped, tag = 'input window, operand 5, single buffered']
    #allocation10 [shape = 's32[1]{0}', space=sflag, size = 0x4, scoped, tag = 'scoped memory for tpu_custom_call.1']
    #allocation11 [shape = 'u8[4096]{0}', space=vmem, size = 0x1000, scoped, tag = 'output window, operand 0, single buffered']
    %12 = vsyncpa [#allocation4], 0
    %13 = vsyncpa [#allocation7], 0
    %14 = vsyncpa [#allocation10], 0
    %15 = vsyncpa [#allocation5], 0
    // Predicated region
    $region2: #{tpu_custom_call.1} parent=1 // pred_check
      _
    $region3: #{tpu_custom_call.1} parent=1 // pred_check_branch
      %17 = sbr.rel (0) target = $region5
    $region4: #{tpu_custom_call.1} parent=1 // pred_region
      %s19 = ssub.s32 256, 256
      %20 = vsyncadd [#allocation4], %s19
      %s21 = sshll.u32 [#allocation3], 4
      %s22 = int_to_ptr.vmem [resolvable:$true] %s21
      %27 = dma.hbm_to_vmem [thread:$0]  %s0, 256, %s22, [#allocation4], 128, 128, 8
    $region5: #{tpu_custom_call.1} parent=1 // pred_fallthru
      _
    // Predicated region
    $region6: #{tpu_custom_call.1} parent=1 // pred_check
      _
    $region7: #{tpu_custom_call.1} parent=1 // pred_check_branch
      %29 = sbr.rel (0) target = $region9
    $region8: #{tpu_custom_call.1} parent=1 // pred_region
      %s31 = ssub.s32 1024, 1024
      %32 = vsyncadd [#allocation7], %s31
      %s33 = sshll.u32 [#allocation6], 4
      %s34 = int_to_ptr.vmem [resolvable:$true] %s33
      %39 = dma.hbm_to_vmem [thread:$0]  %s1, 1024, %s34, [#allocation7], 64, 64, 4
    $region9: #{tpu_custom_call.1} parent=1 // pred_fallthru
      _
    // Predicated region
    $region10: #{tpu_custom_call.1} parent=1 // pred_check
      _
    $region11: #{tpu_custom_call.1} parent=1 // pred_check_branch
      %41 = sbr.rel (0) target = $region13
    $region12: #{tpu_custom_call.1} parent=1 // pred_region
      _
    $region13: #{tpu_custom_call.1} parent=1 // pred_fallthru
      _
    // Predicated region
    $region14: #{tpu_custom_call.1} parent=1 // pred_check
      _
    $region15: #{tpu_custom_call.1} parent=1 // pred_check_branch
      %43 = sbr.rel (0) target = $region17
    $region16: #{tpu_custom_call.1} parent=1 // pred_region
      %s45 = ssub.s32 1024, 1024
      %46 = vsyncadd [#allocation7], %s45
      %s47 = sshll.u32 [#allocation8], 4
      %s48 = int_to_ptr.vmem [resolvable:$true] %s47
      %53 = dma.hbm_to_vmem [thread:$0]  %s3, 1024, %s48, [#allocation7], 64, 64, 4
    $region17: #{tpu_custom_call.1} parent=1 // pred_fallthru
      _
    // Predicated region
    $region18: #{tpu_custom_call.1} parent=1 // pred_check
      _
    $region19: #{tpu_custom_call.1} parent=1 // pred_check_branch
      %55 = sbr.rel (0) target = $region21
    $region20: #{tpu_custom_call.1} parent=1 // pred_region
      _
    $region21: #{tpu_custom_call.1} parent=1 // pred_fallthru
      _
    // Predicated region
    $region22: #{tpu_custom_call.1} parent=1 // pred_check
      _
    $region23: #{tpu_custom_call.1} parent=1 // pred_check_branch
      %57 = sbr.rel (0) target = $region25
    $region24: #{tpu_custom_call.1} parent=1 // pred_region
      %s59 = ssub.s32 1024, 1024
      %60 = vsyncadd [#allocation10], %s59
      %s61 = sshll.u32 [#allocation9], 4
      %s62 = int_to_ptr.vmem [resolvable:$true] %s61
      %67 = dma.hbm_to_vmem [thread:$0]  %s5, 1024, %s62, [#allocation10], 64, 64, 4
    $region25: #{tpu_custom_call.1} parent=1 // pred_fallthru
      _
    // Predicated region
    $region26: #{tpu_custom_call.1} parent=1 // pred_check
      _
    $region27: #{tpu_custom_call.1} parent=1 // pred_check_branch
      %69 = sbr.rel (0) target = $region29
    $region28: #{tpu_custom_call.1} parent=1 // pred_region
      _
    $region29: #{tpu_custom_call.1} parent=1 // pred_fallthru
      _
    // Predicated region
    $region30: #{tpu_custom_call.1} parent=1 // pred_check
      _
    $region31: #{tpu_custom_call.1} parent=1 // pred_check_branch
      %71 = sbr.rel (0) target = $region33
    $region32: #{tpu_custom_call.1} parent=1 // pred_region
      %72 = dma.done [#allocation4], 256
    $region33: #{tpu_custom_call.1} parent=1 // pred_fallthru
      _
    // Predicated region
    $region34: #{tpu_custom_call.1} parent=1 // pred_check
      _
    $region35: #{tpu_custom_call.1} parent=1 // pred_check_branch
      %74 = sbr.rel (0) target = $region37
    $region36: #{tpu_custom_call.1} parent=1 // pred_region
      %75 = dma.done [#allocation7], 1024
    $region37: #{tpu_custom_call.1} parent=1 // pred_fallthru
      _
    // Predicated region
    $region38: #{tpu_custom_call.1} parent=1 // pred_check
      _
    $region39: #{tpu_custom_call.1} parent=1 // pred_check_branch
      %77 = sbr.rel (0) target = $region41
    $region40: #{tpu_custom_call.1} parent=1 // pred_region
      %78 = dma.done [#allocation7], 1024
    $region41: #{tpu_custom_call.1} parent=1 // pred_fallthru
      _
    // Predicated region
    $region42: #{tpu_custom_call.1} parent=1 // pred_check
      _
    $region43: #{tpu_custom_call.1} parent=1 // pred_check_branch
      %80 = sbr.rel (0) target = $region45
    $region44: #{tpu_custom_call.1} parent=1 // pred_region
      %81 = dma.done [#allocation10], 1024
    $region45: #{tpu_custom_call.1} parent=1 // pred_fallthru
      _
    %p83 = scmp.eq.s32.totalorder 0, 0
    // Predicated region
    $region46: #{tpu_custom_call.1} parent=1 // pred_check
      %p84 = pneg %p83
    $region47: #{tpu_custom_call.1} parent=1 // pred_check_branch
      %86 = sbr.rel (%p84) target = $region49
    $region48: #{tpu_custom_call.1} parent=1 // pred_region
      %87 = vst [vmem:[#allocation2] sm:$0xff] 0.0
      %88 = vst [vmem:[#allocation2 + $0x8] sm:$0xff] 0.0
    $region49: #{tpu_custom_call.1} parent=1 // pred_fallthru
      _
    %v89 = vld [vmem:[#allocation3] sm:$0xff]
    %v90 = vld [vmem:[#allocation3 + $0x8] sm:$0xff]
    %v91 = vpack.c.bf16 %v90, %v89
    %v92 = vld [vmem:[#allocation2] sm:$0xff]
    %v93 = vld [vmem:[#allocation2 + $0x8] sm:$0xff]
    %v94 = vld [vmem:[#allocation6] sm:$0xf]
    %v95 = vld [vmem:[#allocation6 + $0x4] sm:$0xf]
    %v96 = vld [vmem:[#allocation6 + $0x8] sm:$0xf]
    %v97 = vld [vmem:[#allocation6 + $0xc] sm:$0xf]
    %v98 = vld [vmem:[#allocation6 + $0x10] sm:$0xf]
    %v99 = vld [vmem:[#allocation6 + $0x14] sm:$0xf]
    %v100 = vld [vmem:[#allocation6 + $0x18] sm:$0xf]
    %v101 = vld [vmem:[#allocation6 + $0x1c] sm:$0xf]
    %v102 = vld [vmem:[#allocation6 + $0x20] sm:$0xf]
    %v103 = vld [vmem:[#allocation6 + $0x24] sm:$0xf]
    %v104 = vld [vmem:[#allocation6 + $0x28] sm:$0xf]
    %v105 = vld [vmem:[#allocation6 + $0x2c] sm:$0xf]
    %v106 = vld [vmem:[#allocation6 + $0x30] sm:$0xf]
    %v107 = vld [vmem:[#allocation6 + $0x34] sm:$0xf]
    %v108 = vld [vmem:[#allocation6 + $0x38] sm:$0xf]
    %v109 = vld [vmem:[#allocation6 + $0x3c] sm:$0xf]
    %v126 = vunpack.c.l.b16 %v94
    %v127 = vunpack.c.l.b16 %v95
    %v128 = vunpack.c.l.b16 %v96
    %v129 = vunpack.c.l.b16 %v97
    %v130 = vunpack.c.l.b16 %v98
    %v131 = vunpack.c.l.b16 %v99
    %v132 = vunpack.c.l.b16 %v100
    %v133 = vunpack.c.l.b16 %v101
    %v134 = vunpack.c.l.b16 %v102
    %v135 = vunpack.c.l.b16 %v103
    %v136 = vunpack.c.l.b16 %v104
    %v137 = vunpack.c.l.b16 %v105
    %v138 = vunpack.c.l.b16 %v106
    %v139 = vunpack.c.l.b16 %v107
    %v140 = vunpack.c.l.b16 %v108
    %v141 = vunpack.c.l.b16 %v109
    %v142 = vpack.c.b16 %v127, %v126
    %v143 = vpack.c.b16 %v129, %v128
    %v144 = vpack.c.b16 %v131, %v130
    %v145 = vpack.c.b16 %v133, %v132
    %v146 = vpack.c.b16 %v135, %v134
    %v147 = vpack.c.b16 %v137, %v136
    %v148 = vpack.c.b16 %v139, %v138
    %v149 = vpack.c.b16 %v141, %v140
    %158 = vmatprep.subr.bf16.mxu0 0
    %159 = vmatpush1.bf16.msra.mxu0 %v149
    %160 = vmatprep.subr.bf16.mxu0 0
    %161 = vmatpush1.bf16.msra.mxu0 %v148
    %162 = vmatprep.subr.bf16.mxu0 0
    %163 = vmatpush1.bf16.msra.mxu0 %v147
    %164 = vmatprep.subr.bf16.mxu0 0
    %165 = vmatpush1.bf16.msra.mxu0 %v146
    %166 = vmatprep.subr.bf16.mxu0 0
    %167 = vmatpush1.bf16.msra.mxu0 %v145
    %168 = vmatprep.subr.bf16.mxu0 0
    %169 = vmatpush1.bf16.msra.mxu0 %v144
    %170 = vmatprep.subr.bf16.mxu0 0
    %171 = vmatpush1.bf16.msra.mxu0 %v143
    %172 = vmatprep.subr.bf16.mxu0 0
    %173 = vmatpush1.bf16.msra.mxu0 %v142
    %174 = vmatprep.subr.bf16.mxu0 0
    %175 = vmatpush2.bf16.msra.mxu0 0
    %176 = vmatprep.subr.bf16.mxu0 0
    %177 = vmatpush2.bf16.msra.mxu0 0
    %178 = vmatprep.subr.bf16.mxu0 0
    %179 = vmatpush2.bf16.msra.mxu0 0
    %180 = vmatprep.subr.bf16.mxu0 0
    %181 = vmatpush2.bf16.msra.mxu0 0
    %182 = vmatprep.subr.bf16.mxu0 0
    %183 = vmatpush2.bf16.msra.mxu0 0
    %184 = vmatprep.subr.bf16.mxu0 0
    %185 = vmatpush2.bf16.msra.mxu0 0
    %186 = vmatprep.subr.bf16.mxu0 0
    %187 = vmatpush2.bf16.msra.mxu0 0
    %188 = vmatprep.subr.bf16.mxu0 0
    %189 = vmatpush2.bf16.msra.mxu0 0
    %190 = vmatprep.mubr.bf16.mxu0 0
    %191 = vmatmul.mubr.bf16.gmra.mxu0 %v91
    %v192 = vpop.f32.mrf.mxu0
    %v193 = vadd.f32 0.0, %v192
    %v194 = vpop.f32.mrf.mxu0
    %v195 = vpop.f32.mrf.mxu0
    %v196 = vadd.f32 0.0, %v195
    %v197 = vpop.f32.mrf.mxu0
    %198 = vdwg.mxu0
    %v199 = vadd.f32 %v92, %v193
    %v200 = vadd.f32 %v93, %v196
    %201 = vst [vmem:[#allocation2] sm:$0xff] %v199
    %202 = vst [vmem:[#allocation2 + $0x8] sm:$0xff] %v200
    // Predicated region
    $region50: #{tpu_custom_call.1} parent=1 // pred_check
      %p203 = pneg %p83
    $region51: #{tpu_custom_call.1} parent=1 // pred_check_branch
      %205 = sbr.rel (%p203) target = $region53
    $region52: #{tpu_custom_call.1} parent=1 // pred_region
      %v206 = vld [vmem:[#allocation2] sm:$0xff]
      %v207 = vld [vmem:[#allocation2 + $0x8] sm:$0xff]
      %v208 = vld [vmem:[%s2] sm:$0x1]
      %v210 = vlaneseq
      %v211 = vshrl.u32 %v210, 7
      %v212 = vsub.s32 0, %v211
      %v213 = vrot.slane %v208, %v212
      %v215 = vadd.f32 %v206, %v213
      %v216 = vadd.f32 %v207, %v213
      %v217 = vmax.f32 %v215, 0.0
      %v218 = vmax.f32 %v216, 0.0
      %v219 = vpack.c.bf16 %v218, %v217
      %v220 = vld [vmem:[#allocation8] sm:$0xf]
      %v221 = vld [vmem:[#allocation8 + $0x4] sm:$0xf]
      %v222 = vld [vmem:[#allocation8 + $0x8] sm:$0xf]
      %v223 = vld [vmem:[#allocation8 + $0xc] sm:$0xf]
      %v224 = vld [vmem:[#allocation8 + $0x10] sm:$0xf]
      %v225 = vld [vmem:[#allocation8 + $0x14] sm:$0xf]
      %v226 = vld [vmem:[#allocation8 + $0x18] sm:$0xf]
      %v227 = vld [vmem:[#allocation8 + $0x1c] sm:$0xf]
      %v228 = vld [vmem:[#allocation8 + $0x20] sm:$0xf]
      %v229 = vld [vmem:[#allocation8 + $0x24] sm:$0xf]
      %v230 = vld [vmem:[#allocation8 + $0x28] sm:$0xf]
      %v231 = vld [vmem:[#allocation8 + $0x2c] sm:$0xf]
      %v232 = vld [vmem:[#allocation8 + $0x30] sm:$0xf]
      %v233 = vld [vmem:[#allocation8 + $0x34] sm:$0xf]
      %v234 = vld [vmem:[#allocation8 + $0x38] sm:$0xf]
      %v235 = vld [vmem:[#allocation8 + $0x3c] sm:$0xf]
      %v236 = vld [vmem:[%s4] sm:$0x1]
      %v238 = vlaneseq
      %v239 = vshrl.u32 %v238, 7
      %v240 = vsub.s32 0, %v239
      %v241 = vrot.slane %v236, %v240
      %v259 = vunpack.c.l.b16 %v220
      %v260 = vunpack.c.l.b16 %v221
      %v261 = vunpack.c.l.b16 %v222
      %v262 = vunpack.c.l.b16 %v223
      %v263 = vunpack.c.l.b16 %v224
      %v264 = vunpack.c.l.b16 %v225
      %v265 = vunpack.c.l.b16 %v226
      %v266 = vunpack.c.l.b16 %v227
      %v267 = vunpack.c.l.b16 %v228
      %v268 = vunpack.c.l.b16 %v229
      %v269 = vunpack.c.l.b16 %v230
      %v270 = vunpack.c.l.b16 %v231
      %v271 = vunpack.c.l.b16 %v232
      %v272 = vunpack.c.l.b16 %v233
      %v273 = vunpack.c.l.b16 %v234
      %v274 = vunpack.c.l.b16 %v235
      %v275 = vpack.c.b16 %v260, %v259
      %v276 = vpack.c.b16 %v262, %v261
      %v277 = vpack.c.b16 %v264, %v263
      %v278 = vpack.c.b16 %v266, %v265
      %v279 = vpack.c.b16 %v268, %v267
      %v280 = vpack.c.b16 %v270, %v269
      %v281 = vpack.c.b16 %v272, %v271
      %v282 = vpack.c.b16 %v274, %v273
      %291 = vmatprep.subr.bf16.mxu0 0
      %292 = vmatpush1.bf16.msra.mxu0 %v282
      %293 = vmatprep.subr.bf16.mxu0 0
      %294 = vmatpush1.bf16.msra.mxu0 %v281
      %295 = vmatprep.subr.bf16.mxu0 0
      %296 = vmatpush1.bf16.msra.mxu0 %v280
      %297 = vmatprep.subr.bf16.mxu0 0
      %298 = vmatpush1.bf16.msra.mxu0 %v279
      %299 = vmatprep.subr.bf16.mxu0 0
      %300 = vmatpush1.bf16.msra.mxu0 %v278
      %301 = vmatprep.subr.bf16.mxu0 0
      %302 = vmatpush1.bf16.msra.mxu0 %v277
      %303 = vmatprep.subr.bf16.mxu0 0
      %304 = vmatpush1.bf16.msra.mxu0 %v276
      %305 = vmatprep.subr.bf16.mxu0 0
      %306 = vmatpush1.bf16.msra.mxu0 %v275
      %307 = vmatprep.subr.bf16.mxu0 0
      %308 = vmatpush2.bf16.msra.mxu0 0
      %309 = vmatprep.subr.bf16.mxu0 0
      %310 = vmatpush2.bf16.msra.mxu0 0
      %311 = vmatprep.subr.bf16.mxu0 0
      %312 = vmatpush2.bf16.msra.mxu0 0
      %313 = vmatprep.subr.bf16.mxu0 0
      %314 = vmatpush2.bf16.msra.mxu0 0
      %315 = vmatprep.subr.bf16.mxu0 0
      %316 = vmatpush2.bf16.msra.mxu0 0
      %317 = vmatprep.subr.bf16.mxu0 0
      %318 = vmatpush2.bf16.msra.mxu0 0
      %319 = vmatprep.subr.bf16.mxu0 0
      %320 = vmatpush2.bf16.msra.mxu0 0
      %321 = vmatprep.subr.bf16.mxu0 0
      %322 = vmatpush2.bf16.msra.mxu0 0
      %323 = vmatprep.mubr.bf16.mxu0 0
      %324 = vmatmul.mubr.bf16.gmra.mxu0 %v219
      %v325 = vpop.f32.mrf.mxu0
      %v326 = vadd.f32 %v241, %v325
      %v327 = vpop.f32.mrf.mxu0
      %v328 = vpop.f32.mrf.mxu0
      %v329 = vadd.f32 %v241, %v328
      %v330 = vpop.f32.mrf.mxu0
      %331 = vdwg.mxu0
      %v332 = vmax.f32 %v326, 0.0
      %v333 = vmax.f32 %v329, 0.0
      %v334 = vpack.c.bf16 %v333, %v332
      %v335 = vld [vmem:[#allocation9] sm:$0xf]
      %v336 = vld [vmem:[#allocation9 + $0x4] sm:$0xf]
      %v337 = vld [vmem:[#allocation9 + $0x8] sm:$0xf]
      %v338 = vld [vmem:[#allocation9 + $0xc] sm:$0xf]
      %v339 = vld [vmem:[#allocation9 + $0x10] sm:$0xf]
      %v340 = vld [vmem:[#allocation9 + $0x14] sm:$0xf]
      %v341 = vld [vmem:[#allocation9 + $0x18] sm:$0xf]
      %v342 = vld [vmem:[#allocation9 + $0x1c] sm:$0xf]
      %v343 = vld [vmem:[#allocation9 + $0x20] sm:$0xf]
      %v344 = vld [vmem:[#allocation9 + $0x24] sm:$0xf]
      %v345 = vld [vmem:[#allocation9 + $0x28] sm:$0xf]
      %v346 = vld [vmem:[#allocation9 + $0x2c] sm:$0xf]
      %v347 = vld [vmem:[#allocation9 + $0x30] sm:$0xf]
      %v348 = vld [vmem:[#allocation9 + $0x34] sm:$0xf]
      %v349 = vld [vmem:[#allocation9 + $0x38] sm:$0xf]
      %v350 = vld [vmem:[#allocation9 + $0x3c] sm:$0xf]
      %v351 = vld [vmem:[%s6] sm:$0x1]
      %v353 = vlaneseq
      %v354 = vshrl.u32 %v353, 7
      %v355 = vsub.s32 0, %v354
      %v356 = vrot.slane %v351, %v355
      %v374 = vunpack.c.l.b16 %v335
      %v375 = vunpack.c.l.b16 %v336
      %v376 = vunpack.c.l.b16 %v337
      %v377 = vunpack.c.l.b16 %v338
      %v378 = vunpack.c.l.b16 %v339
      %v379 = vunpack.c.l.b16 %v340
      %v380 = vunpack.c.l.b16 %v341
      %v381 = vunpack.c.l.b16 %v342
      %v382 = vunpack.c.l.b16 %v343
      %v383 = vunpack.c.l.b16 %v344
      %v384 = vunpack.c.l.b16 %v345
      %v385 = vunpack.c.l.b16 %v346
      %v386 = vunpack.c.l.b16 %v347
      %v387 = vunpack.c.l.b16 %v348
      %v388 = vunpack.c.l.b16 %v349
      %v389 = vunpack.c.l.b16 %v350
      %v390 = vpack.c.b16 %v375, %v374
      %v391 = vpack.c.b16 %v377, %v376
      %v392 = vpack.c.b16 %v379, %v378
      %v393 = vpack.c.b16 %v381, %v380
      %v394 = vpack.c.b16 %v383, %v382
      %v395 = vpack.c.b16 %v385, %v384
      %v396 = vpack.c.b16 %v387, %v386
      %v397 = vpack.c.b16 %v389, %v388
      %406 = vmatprep.subr.bf16.mxu0 0
      %407 = vmatpush1.bf16.msra.mxu0 %v397
      %408 = vmatprep.subr.bf16.mxu0 0
      %409 = vmatpush1.bf16.msra.mxu0 %v396
      %410 = vmatprep.subr.bf16.mxu0 0
      %411 = vmatpush1.bf16.msra.mxu0 %v395
      %412 = vmatprep.subr.bf16.mxu0 0
      %413 = vmatpush1.bf16.msra.mxu0 %v394
      %414 = vmatprep.subr.bf16.mxu0 0
      %415 = vmatpush1.bf16.msra.mxu0 %v393
      %416 = vmatprep.subr.bf16.mxu0 0
      %417 = vmatpush1.bf16.msra.mxu0 %v392
      %418 = vmatprep.subr.bf16.mxu0 0
      %419 = vmatpush1.bf16.msra.mxu0 %v391
      %420 = vmatprep.subr.bf16.mxu0 0
      %421 = vmatpush1.bf16.msra.mxu0 %v390
      %422 = vmatprep.subr.bf16.mxu0 0
      %423 = vmatpush2.bf16.msra.mxu0 0
      %424 = vmatprep.subr.bf16.mxu0 0
      %425 = vmatpush2.bf16.msra.mxu0 0
      %426 = vmatprep.subr.bf16.mxu0 0
      %427 = vmatpush2.bf16.msra.mxu0 0
      %428 = vmatprep.subr.bf16.mxu0 0
      %429 = vmatpush2.bf16.msra.mxu0 0
      %430 = vmatprep.subr.bf16.mxu0 0
      %431 = vmatpush2.bf16.msra.mxu0 0
      %432 = vmatprep.subr.bf16.mxu0 0
      %433 = vmatpush2.bf16.msra.mxu0 0
      %434 = vmatprep.subr.bf16.mxu0 0
      %435 = vmatpush2.bf16.msra.mxu0 0
      %436 = vmatprep.subr.bf16.mxu0 0
      %437 = vmatpush2.bf16.msra.mxu0 0
      %438 = vmatprep.mubr.bf16.mxu0 0
      %439 = vmatmul.mubr.bf16.gmra.mxu0 %v334
      %v440 = vpop.f32.mrf.mxu0
      %v441 = vadd.f32 %v356, %v440
      %v442 = vpop.f32.mrf.mxu0
      %v443 = vpop.f32.mrf.mxu0
      %v444 = vadd.f32 %v356, %v443
      %v445 = vpop.f32.mrf.mxu0
      %446 = vdwg.mxu0
      %v447 = vpack.c.bf16 %v444, %v441
      %v449 = vunpack.c.l.b16 %v447
      %v450 = vunpack.c.h.b16 %v447
      %v451 = vpack.c.b16 %v449, %v449
      %v452 = vpack.c.b16 %v450, %v450
      %455 = vst [vmem:[#allocation11] sm:$0xf] %v451
      %456 = vst [vmem:[#allocation11 + $0x4] sm:$0xf] %v452
    $region53: #{tpu_custom_call.1} parent=1 // pred_fallthru
      _
    // Predicated region
    $region54: #{tpu_custom_call.1} parent=1 // pred_check
      _
    $region55: #{tpu_custom_call.1} parent=1 // pred_check_branch
      %458 = sbr.rel (0) target = $region57
    $region56: #{tpu_custom_call.1} parent=1 // pred_region
      %s460 = ssub.s32 128, 128
      %461 = vsyncadd [#allocation5], %s460
      %s462 = sshll.u32 [#allocation11], 4
      %s463 = int_to_ptr.vmem [resolvable:$true] %s462
      %468 = dma.vmem_to_hbm [thread:$0]  %s463, 128, %s7, [#allocation5], 64, 64, 4
    $region57: #{tpu_custom_call.1} parent=1 // pred_fallthru
      _
    // Predicated region
    $region58: #{tpu_custom_call.1} parent=1 // pred_check
      _
    $region59: #{tpu_custom_call.1} parent=1 // pred_check_branch
      %470 = sbr.rel (0) target = $region61
    $region60: #{tpu_custom_call.1} parent=1 // pred_region
      %471 = dma.done [#allocation5], 128
    $region61: #{tpu_custom_call.1} parent=1 // pred_fallthru
      _
    %472 = vsyncpa [#allocation4], 1
    %473 = vsyncpa [#allocation7], 1
    %474 = vsyncpa [#allocation10], 1
    %475 = vsyncpa [#allocation5], 1

</llo_original>
